<compile_context>
chip_gen: v7x
topology: tpu7x:2x2x1
jax: 0.10.0
libtpu: 0.0.40
codegen_flags: <defaults>
</compile_context>

<pallas_src>
import jax
import jax.numpy as jnp
from jax import lax
from jax.experimental import pallas as pl
from jax.experimental.pallas import tpu as pltpu


def _round_up(x, m):
    return ((x + m - 1) // m) * m


def _cdiv(a, b):
    return -(-a // b)


def _vmem_limit_bytes():
    """Generation-aware scoped-VMEM limit (~75% of physical, capped)."""
    cap = 64 * 1024 * 1024                     # conservative fallback (v7x per-TC)
    try:
        info = pltpu.get_tpu_info()
        cap = int(getattr(info, "vmem_capacity_bytes", cap)) or cap
    except Exception:
        pass
    return min(int(cap * 0.75), 96 * 1024 * 1024)


def _choose_tm(m8, tk, tn, in_bytes, out_bytes, budget):
    """Largest 256-aligned row tile whose double-buffered working set fits."""
    fixed = 2 * tk * tn * in_bytes + 2 * tn * 4                  # weights + bias
    per_row = 2 * tk * in_bytes + 2 * tn * out_bytes + tn * 4    # patches+out+acc
    tm = (budget - fixed) // max(per_row, 1)
    tm = int(max(256, min(tm, 2048)))
    tm -= tm % 256
    if m8 > 256:
        # Keep >= 2 grid steps along M: feeds both TensorCores on v7x and
        # keeps the input/output DMA pipeline busy.
        tm = min(tm, _round_up(_cdiv(m8, 2), 256))
    else:
        tm = _round_up(m8, 8)
    return max(tm, 8)


def _complex_matmul_kernel(p_ref, w_ref, b_ref, o_ref, acc_ref):
    """One (tm, tn) tile of  out = P_c @ W_big + bias  with K-axis reduction."""
    k = pl.program_id(2)

    @pl.when(k == 0)
    def _init():
        acc_ref[...] = jnp.zeros_like(acc_ref)

    acc_ref[...] += jnp.dot(p_ref[...], w_ref[...],
                            preferred_element_type=jnp.float32)

    @pl.when(k == pl.num_programs(2) - 1)
    def _store():
        o_ref[...] = (acc_ref[...] + b_ref[...]).astype(o_ref.dtype)


def _extract_patches(x_nhwc, kh, kw, stride, padding, dilation):
    """im2col for NHWC input. Returns (B*OH*OW, KH*KW*C), OH, OW."""
    if padding > 0:
        x_nhwc = jnp.pad(
            x_nhwc, ((0, 0), (padding, padding), (padding, padding), (0, 0)))
    B, H, W, C = x_nhwc.shape
    OH = (H - dilation * (kh - 1) - 1) // stride + 1
    OW = (W - dilation * (kw - 1) - 1) // stride + 1
    cols = []
    for ih in range(kh):
        for iw in range(kw):
            h0 = ih * dilation
            w0 = iw * dilation
            cols.append(x_nhwc[:, h0:h0 + stride * (OH - 1) + 1:stride,
                                  w0:w0 + stride * (OW - 1) + 1:stride, :])
    p = jnp.stack(cols, axis=3)                     # (B, OH, OW, KH*KW, C)
    return p.reshape(B * OH * OW, kh * kw * C), OH, OW


def complex_conv2d(x_r, x_i, w_r, w_i, b_r=None, b_i=None,
                   stride=1, padding=0, dilation=1, groups=1,
                   compute_dtype=None):
    """ComplexConv2d.forward(input_r, input_i) -> (out_r, out_i), NCHW."""
    assert groups == 1  # TODO(synk): grouped convolution not implemented
    assert x_r.shape == x_i.shape and x_r.dtype == x_i.dtype
    B, Cin, H, W = x_r.shape
    Cout, Cin_w, KH, KW = w_r.shape
    assert Cin_w == Cin and w_i.shape == w_r.shape
    out_dtype = x_r.dtype
    in_dtype = out_dtype if compute_dtype is None else compute_dtype

    if b_r is None:
        b_r = jnp.zeros((Cout,), out_dtype)
    if b_i is None:
        b_i = jnp.zeros((Cout,), out_dtype)

    # ---- wrapper-side layout work (data movement only) -----------------------
    # Stack real/imag along channels, go NHWC, single im2col over both.
    x_c = jnp.concatenate([x_r, x_i], axis=1)                 # (B, 2*Cin, H, W)
    x_c = jnp.transpose(x_c, (0, 2, 3, 1))                    # NHWC
    patches, OH, OW = _extract_patches(x_c, KH, KW, stride, padding, dilation)
    M = B * OH * OW
    K2 = 2 * Cin * KH * KW

    # Weights: (Cout, Cin, KH, KW) -> (KH, KW, Cin, Cout), then complex-stack
    # along the (2*Cin) contraction axis and the (2*Coutp) output axis.
    wr_t = jnp.transpose(w_r, (2, 3, 1, 0))
    wi_t = jnp.transpose(w_i, (2, 3, 1, 0))
    Coutp = _round_up(Cout, 128)                              # lane-dense N
    pad_n = ((0, 0), (0, 0), (0, 0), (0, Coutp - Cout))
    w_real = jnp.pad(jnp.concatenate([wr_t, -wi_t], axis=2), pad_n)  # -> out_r
    w_imag = jnp.pad(jnp.concatenate([wi_t, wr_t], axis=2), pad_n)   # -> out_i
    w_big = jnp.concatenate([w_real, w_imag], axis=3).reshape(K2, 2 * Coutp)

    bias_r = jnp.pad((b_r - b_i).astype(jnp.float32), (0, Coutp - Cout))
    bias_i = jnp.pad((b_r + b_i).astype(jnp.float32), (0, Coutp - Cout))
    bias = jnp.concatenate([bias_r, bias_i]).reshape(1, 2 * Coutp)

    N2 = 2 * Coutp

    # ---- tile selection -------------------------------------------------------
    in_bytes = jnp.dtype(in_dtype).itemsize
    out_bytes = jnp.dtype(out_dtype).itemsize

    # N tile: multiple of 128 that divides N2 (N2 is a multiple of 256).
    tn = N2 if N2 <= 512 else 512
    if N2 % tn:
        tn = 256

    # K tile: whole contraction if small; else ~2048-wide 128-aligned chunks,
    # with K2 zero-padded up to a multiple (zeros contribute nothing).
    if K2 <= 2048:
        tk, K2p = K2, K2
    else:
        tk = _round_up(_cdiv(K2, _cdiv(K2, 2048)), 128)
        K2p = _round_up(K2, tk)

    M8 = _round_up(M, 8)

    vmem_limit = _vmem_limit_bytes()
    tm = _choose_tm(M8, tk, tn, in_bytes, out_bytes, int(vmem_limit * 0.8))

    pad_rows = M8 - M
    pad_k = K2p - K2
    if pad_rows or pad_k:
        patches = jnp.pad(patches, ((0, pad_rows), (0, pad_k)))
    if pad_k:
        w_big = jnp.pad(w_big, ((0, pad_k), (0, 0)))
    patches = patches.astype(in_dtype)
    w_big = w_big.astype(in_dtype)

    gm = _cdiv(M8, tm)          # tail M block is masked by Pallas
    gn = N2 // tn
    gk = K2p // tk
    grid = (gm, gn, gk)

    cost = pl.CostEstimate(
        flops=2 * M8 * K2p * N2,
        transcendentals=0,
        bytes_accessed=int(M8 * K2p * in_bytes + K2p * N2 * in_bytes
                           + M8 * N2 * out_bytes + N2 * 4))

    out_flat = pl.pallas_call(
        _complex_matmul_kernel,
        out_shape=jax.ShapeDtypeStruct((M8, N2), out_dtype),
        grid=grid,
        in_specs=[
            pl.BlockSpec((tm, tk), lambda i, j, k: (i, k)),   # patches
            pl.BlockSpec((tk, tn), lambda i, j, k: (k, j)),   # stacked weights
            pl.BlockSpec((1, tn), lambda i, j, k: (0, j)),    # stacked bias
        ],
        out_specs=pl.BlockSpec((tm, tn), lambda i, j, k: (i, j)),
        scratch_shapes=[pltpu.VMEM((tm, tn), jnp.float32)],
        compiler_params=pltpu.CompilerParams(
            dimension_semantics=("parallel", "parallel", "arbitrary"),
            vmem_limit_bytes=vmem_limit),
        cost_estimate=cost,
    )(patches, w_big, bias)

    out_r = out_flat[:M, :Cout].reshape(B, OH, OW, Cout).transpose(0, 3, 1, 2)
    out_i = out_flat[:M, Coutp:Coutp + Cout].reshape(
        B, OH, OW, Cout).transpose(0, 3, 1, 2)
    return out_r, out_i


if __name__ == "__main__":
    key = jax.random.PRNGKey(0)
    k1, k2, k3, k4, k5, k6 = jax.random.split(key, 6)

    B, Cin, Cout, H, W, K = 2, 4, 8, 16, 16, 3     # NCHW, like the PyTorch module
    x_r = jax.random.normal(k1, (B, Cin, H, W), dtype=jnp.float32)
    x_i = jax.random.normal(k2, (B, Cin, H, W), dtype=jnp.float32)
    w_r = jax.random.normal(k3, (Cout, Cin, K, K), dtype=jnp.float32) * 0.1
    w_i = jax.random.normal(k4, (Cout, Cin, K, K), dtype=jnp.float32) * 0.1
    b_r = jax.random.normal(k5, (Cout,), dtype=jnp.float32) * 0.1
    b_i = jax.random.normal(k6, (Cout,), dtype=jnp.float32) * 0.1

    out_r, out_i = complex_conv2d(x_r, x_i, w_r, w_i, b_r, b_i,
                                  stride=1, padding=0, dilation=1)
    out_r = jax.block_until_ready(out_r)
    out_i = jax.block_until_ready(out_i)

    # Pure-JAX reference (XLA convolution), same math as the PyTorch module.
    def conv(x, w, b):
        y = lax.conv_general_dilated(
            x, w, window_strides=(1, 1), padding="VALID",
            dimension_numbers=("NCHW", "OIHW", "NCHW"),
            precision=lax.Precision.HIGHEST)
        return y + b[None, :, None, None]

    ref_r = conv(x_r, w_r, b_r) - conv(x_i, w_i, b_i)
    ref_i = conv(x_i, w_r, b_r) + conv(x_r, w_i, b_i)

    assert out_r.shape == (B, Cout, H - K + 1, W - K + 1)
    assert out_i.shape == (B, Cout, H - K + 1, W - K + 1)
    assert bool(jnp.allclose(out_r, ref_r, atol=1e-3, rtol=1e-3))
    assert bool(jnp.allclose(out_i, ref_i, atol=1e-3, rtol=1e-3))

    print("KERNEL_OK")
</pallas_src>

<mosaic_0001>
module attributes {stable_mosaic.version = 11 : i64} {
  func.func @_complex_matmul_kernel(%arg0: i32, %arg1: i32, %arg2: i32, %arg3: memref<256x72xf32, #tpu.memory_space<vmem>>, %arg4: memref<72x256xf32, #tpu.memory_space<vmem>>, %arg5: memref<1x256xf32, #tpu.memory_space<vmem>>, %arg6: memref<256x256xf32, #tpu.memory_space<vmem>>, %arg7: memref<256x256xf32, #tpu.memory_space<vmem>>) attributes {dimension_semantics = [#tpu.dimension_semantics<parallel>, #tpu.dimension_semantics<parallel>, #tpu.dimension_semantics<arbitrary>], iteration_bounds = array<i64: 2, 1, 1>, scalar_prefetch = 0 : i64, scratch_operands = 1 : i64, tpu.core_type = #tpu.core_type<tc>, window_params = [{transform_indices = @transform_0, window_bounds = array<i64: 256, 72>}, {transform_indices = @transform_1, window_bounds = array<i64: 72, 256>}, {transform_indices = @transform_2, window_bounds = array<i64: 1, 256>}, {transform_indices = @transform_3, window_bounds = array<i64: 256, 256>}]} {
    %c0_i32 = arith.constant 0 : i32
    %0 = arith.cmpi eq, %arg2, %c0_i32 : i32
    %1 = arith.extui %0 : i1 to i32
    %c0_i32_0 = arith.constant 0 : i32
    %2 = arith.cmpi ne, %1, %c0_i32_0 : i32
    scf.if %2 {
      %cst_10 = arith.constant 0.000000e+00 : f32
      %12 = vector.broadcast %cst_10 : f32 to vector<256x256xf32>
      %c0_11 = arith.constant 0 : index
      %c0_12 = arith.constant 0 : index
      %13 = vector.load %arg7[%c0_11, %c0_12] : memref<256x256xf32, #tpu.memory_space<vmem>>, vector<256x256xf32>
      tpu.vector_store %arg7[%c0_11, %c0_12], %12 {strides = array<i32>} : memref<256x256xf32, #tpu.memory_space<vmem>>, vector<256x256xf32>,
    } else {
    }
    %c0 = arith.constant 0 : index
    %c0_1 = arith.constant 0 : index
    %3 = vector.load %arg7[%c0, %c0_1] : memref<256x256xf32, #tpu.memory_space<vmem>>, vector<256x256xf32>
    %c0_2 = arith.constant 0 : index
    %c0_3 = arith.constant 0 : index
    %4 = vector.load %arg3[%c0_2, %c0_3] : memref<256x72xf32, #tpu.memory_space<vmem>>, vector<256x72xf32>
    %c0_4 = arith.constant 0 : index
    %c0_5 = arith.constant 0 : index
    %5 = vector.load %arg4[%c0_4, %c0_5] : memref<72x256xf32, #tpu.memory_space<vmem>>, vector<72x256xf32>
    %cst = arith.constant dense<0.000000e+00> : vector<256x256xf32>
    %6 = tpu.matmul %4, %5, %cst {dimension_numbers = #tpu.dot_dimension_numbers<[1], [0], [0], [1], [0, 0, 1, 1], [], []>} : vector<256x72xf32>, vector<72x256xf32>, vector<256x256xf32> -> vector<256x256xf32>
    %7 = arith.addf %3, %6 : vector<256x256xf32>
    %c0_6 = arith.constant 0 : index
    %c0_7 = arith.constant 0 : index
    %8 = vector.load %arg7[%c0_6, %c0_7] : memref<256x256xf32, #tpu.memory_space<vmem>>, vector<256x256xf32>
    tpu.vector_store %arg7[%c0_6, %c0_7], %7 {strides = array<i32>} : memref<256x256xf32, #tpu.memory_space<vmem>>, vector<256x256xf32>,
    %c0_i32_8 = arith.constant 0 : i32
    %9 = arith.cmpi eq, %arg2, %c0_i32_8 : i32
    %10 = arith.extui %9 : i1 to i32
    %c0_i32_9 = arith.constant 0 : i32
    %11 = arith.cmpi ne, %10, %c0_i32_9 : i32
    scf.if %11 {
      %c0_10 = arith.constant 0 : index
      %c0_11 = arith.constant 0 : index
      %12 = vector.load %arg7[%c0_10, %c0_11] : memref<256x256xf32, #tpu.memory_space<vmem>>, vector<256x256xf32>
      %c0_12 = arith.constant 0 : index
      %c0_13 = arith.constant 0 : index
      %13 = vector.load %arg5[%c0_12, %c0_13] : memref<1x256xf32, #tpu.memory_space<vmem>>, vector<1x256xf32>
      %14 = vector.broadcast %13 : vector<1x256xf32> to vector<256x256xf32>
      %15 = arith.addf %12, %14 : vector<256x256xf32>
      %c0_14 = arith.constant 0 : index
      %c0_15 = arith.constant 0 : index
      %16 = vector.load %arg6[%c0_14, %c0_15] : memref<256x256xf32, #tpu.memory_space<vmem>>, vector<256x256xf32>
      tpu.vector_store %arg6[%c0_14, %c0_15], %15 {strides = array<i32>} : memref<256x256xf32, #tpu.memory_space<vmem>>, vector<256x256xf32>,
    } else {
    }
    return
  }
  func.func @transform_0(%arg0: i32, %arg1: i32, %arg2: i32) -> (i32, i32) {
    %c0_i32 = arith.constant 0 : i32
    return %arg0, %arg2 : i32, i32
  }
  func.func @transform_1(%arg0: i32, %arg1: i32, %arg2: i32) -> (i32, i32) {
    %c0_i32 = arith.constant 0 : i32
    return %arg2, %arg1 : i32, i32
  }
  func.func @transform_2(%arg0: i32, %arg1: i32, %arg2: i32) -> (i32, i32) {
    %c0_i32 = arith.constant 0 : i32
    %c0_i32_0 = arith.constant 0 : i32
    return %c0_i32, %arg1 : i32, i32
  }
  func.func @transform_3(%arg0: i32, %arg1: i32, %arg2: i32) -> (i32, i32) {
    %c0_i32 = arith.constant 0 : i32
    return %arg0, %arg1 : i32, i32
  }
}

</mosaic_0001>

<llo_original>
// kernel: tpu_custom_call.1
$region0: #{tpu_custom_call.1}
  #allocation0 [shape = 'u32[]', space=smem, size = 0x4, offset = 0x4, fixed_abs, tag = 'smem constant byte address 0x4 - core index']
  #allocation1 [shape = 'u32[144,128]{1,0:T(1,128)}', space=vmem, size = 0x12000, scoped, tag = 'internal scratch']
  #allocation2 [shape = 'f32[256,256]{1,0:T(8,128)}', space=vmem, size = 0x40000, scoped, tag = 'scratch operand']
  %s0 = inlined_call_operand.vmem [shape: f32[392,72], index: 0, kind: input, shape index: {}]
  %s1 = inlined_call_operand.vmem [shape: f32[72,256], index: 1, kind: input, shape index: {}]
  %s2 = inlined_call_operand.vmem [shape: f32[1,256], index: 2, kind: input, shape index: {}]
  %s3 = inlined_call_operand.hbm [shape: f32[392,256], index: 3, kind: output, shape index: {}]
  %s4 = sld [smem:[#allocation0]]
  $region53: #{tpu_custom_call.1} parent=0
    _
  %s6 = ssub.s32 1, %s4
  %s7 = scalar_select 0, %s6, %s4
  $region1: #{tpu_custom_call.1} parent=0
    #allocation3 [shape = 'u8[524288]{0}', space=vmem, size = 0x80000, scoped, tag = 'output window, operand 0']
    #allocation4 [shape = 's32[2]{0}', space=sflag, size = 0x8, scoped, tag = 'scoped memory for tpu_custom_call.1']
    %8 = vsyncpa [#allocation4], 0
    %s9 = scalar_lea.sflag [#allocation4], 1
    %10 = vsyncpa %s9, 0
    loop: start=0, step=1, limit=4
    $region2: #{tpu_custom_call.1} parent=1 // loop_pre_header
      _
    $region3: #{tpu_custom_call.1} parent=1 // loop_header
      %s12 = sphi 0, %s16
      %p13 = scmp.ge.s32.totalorder %s12, 4
      %s19 = sphi 0, %s38
      %s20 = sphi 0, %s34
      %s21 = sphi 0, %s30
      %s22 = sphi 0, %s19
      %s23 = sphi 0, %s20
      %s24 = sphi 0, %s21
      %s25 = sphi 0, %s22
      %s26 = sphi 0, %s23
      %s27 = sphi 0, %s24
      %s43 = sphi 0, %s45
      %s46 = sphi 0, %s43
      %s47 = sphi 0, %s46
      %s63 = sphi 0, %s47
      %s71 = sphi 0, %s73
      %s74 = sphi 0, %s71
      %s75 = sphi 0, %s74
      %s91 = sphi 0, %s75
      %s97 = sphi 0, %s99
      %s100 = sphi 0, %s97
      %s101 = sphi 0, %s100
      %s117 = sphi 0, %s101
      %s125 = sphi 0, %s127
      %s128 = sphi 0, %s125
      %s129 = sphi 0, %s128
      %s145 = sphi 0, %s129
    $region4: #{tpu_custom_call.1} parent=1 // loop_header_branch
      %15 = sbr.rel (%p13) target = $region8
    $region5: #{tpu_custom_call.1} parent=1 // loop_body
      %s17 = ssub.s32 %s12, 1
      %s18 = ssub.s32 %s12, 2
      %s28 = sadd.s32 1, %s21
      %p29 = scmp.ge.s32.totalorder %s28, 1
      %s30 = scalar_select %p29, 0, %s28
      %s31 = sadd.s32 1, %s20
      %s32 = scalar_select %p29, %s31, %s20
      %p33 = scmp.ge.s32.totalorder %s32, 1
      %s34 = scalar_select %p33, 0, %s32
      %s35 = sadd.s32 1, %s19
      %s36 = scalar_select %p33, %s35, %s19
      %p37 = scmp.ge.s32.totalorder %s36, 2
      %s38 = scalar_select %p37, 0, %s36
      %s39 = ssub.s32 %s19, %s38
      %s40 = ssub.s32 %s21, %s30
      %s41 = sor.u32 %s39, %s40
      %p42 = scmp.eq.s32.totalorder %s41, 0
      %s44 = sadd.s32 %s43, 1
      %s45 = scalar_select %p42, %s43, %s44
      %p48 = pneg %p42
      %p49 = scmp.eq.s32.totalorder %s12, 1
      %p50 = por %p48, %p49
      %p51 = scmp.ne.s32.totalorder %s43, %s46
      %p52 = scmp.eq.s32.totalorder %s12, 0
      %p53 = por %p51, %p52
      %p54 = scmp.ne.s32.totalorder %s43, %s46
      %p55 = scmp.eq.s32.totalorder %s17, 1
      %p56 = por %p54, %p55
      %p57 = scmp.ne.s32.totalorder %s46, %s47
      %p58 = scmp.eq.s32.totalorder %s17, 0
      %p59 = por %p57, %p58
      %p60 = scmp.ne.s32.totalorder %s46, %s47
      %p61 = scmp.eq.s32.totalorder %s18, 1
      %p62 = por %p60, %p61
      %p64 = scmp.ne.s32.totalorder %s47, %s63
      %p65 = scmp.eq.s32.totalorder %s18, 0
      %p66 = por %p64, %p65
      %s67 = ssub.s32 %s21, %s30
      %s68 = ssub.s32 %s20, %s34
      %s69 = sor.u32 %s67, %s68
      %p70 = scmp.eq.s32.totalorder %s69, 0
      %s72 = sadd.s32 %s71, 1
      %s73 = scalar_select %p70, %s71, %s72
      %p76 = pneg %p70
      %p77 = scmp.eq.s32.totalorder %s12, 1
      %p78 = por %p76, %p77
      %p79 = scmp.ne.s32.totalorder %s71, %s74
      %p80 = scmp.eq.s32.totalorder %s12, 0
      %p81 = por %p79, %p80
      %p82 = scmp.ne.s32.totalorder %s71, %s74
      %p83 = scmp.eq.s32.totalorder %s17, 1
      %p84 = por %p82, %p83
      %p85 = scmp.ne.s32.totalorder %s74, %s75
      %p86 = scmp.eq.s32.totalorder %s17, 0
      %p87 = por %p85, %p86
      %p88 = scmp.ne.s32.totalorder %s74, %s75
      %p89 = scmp.eq.s32.totalorder %s18, 1
      %p90 = por %p88, %p89
      %p92 = scmp.ne.s32.totalorder %s75, %s91
      %p93 = scmp.eq.s32.totalorder %s18, 0
      %p94 = por %p92, %p93
      %s95 = ssub.s32 %s20, %s34
      %p96 = scmp.eq.s32.totalorder %s95, 0
      %s98 = sadd.s32 %s97, 1
      %s99 = scalar_select %p96, %s97, %s98
      %p102 = pneg %p96
      %p103 = scmp.eq.s32.totalorder %s12, 1
      %p104 = por %p102, %p103
      %p105 = scmp.ne.s32.totalorder %s97, %s100
      %p106 = scmp.eq.s32.totalorder %s12, 0
      %p107 = por %p105, %p106
      %p108 = scmp.ne.s32.totalorder %s97, %s100
      %p109 = scmp.eq.s32.totalorder %s17, 1
      %p110 = por %p108, %p109
      %p111 = scmp.ne.s32.totalorder %s100, %s101
      %p112 = scmp.eq.s32.totalorder %s17, 0
      %p113 = por %p111, %p112
      %p114 = scmp.ne.s32.totalorder %s100, %s101
      %p115 = scmp.eq.s32.totalorder %s18, 1
      %p116 = por %p114, %p115
      %p118 = scmp.ne.s32.totalorder %s101, %s117
      %p119 = scmp.eq.s32.totalorder %s18, 0
      %p120 = por %p118, %p119
      %s121 = ssub.s32 %s19, %s38
      %s122 = ssub.s32 %s20, %s34
      %s123 = sor.u32 %s121, %s122
      %p124 = scmp.eq.s32.totalorder %s123, 0
      %s126 = sadd.s32 %s125, 1
      %s127 = scalar_select %p124, %s125, %s126
      %p130 = pneg %p124
      %p131 = scmp.eq.s32.totalorder %s12, 1
      %p132 = por %p130, %p131
      %p133 = scmp.ne.s32.totalorder %s125, %s128
      %p134 = scmp.eq.s32.totalorder %s12, 0
      %p135 = por %p133, %p134
      %p136 = scmp.ne.s32.totalorder %s125, %s128
      %p137 = scmp.eq.s32.totalorder %s17, 1
      %p138 = por %p136, %p137
      %p139 = scmp.ne.s32.totalorder %s128, %s129
      %p140 = scmp.eq.s32.totalorder %s17, 0
      %p141 = por %p139, %p140
      %p142 = scmp.ne.s32.totalorder %s128, %s129
      %p143 = scmp.eq.s32.totalorder %s18, 1
      %p144 = por %p142, %p143
      %p146 = scmp.ne.s32.totalorder %s129, %s145
      %p147 = scmp.eq.s32.totalorder %s18, 0
      %p148 = por %p146, %p147
      %p149 = scmp.le.s32.totalorder 1, %s12
      %p150 = scmp.lt.s32.totalorder %s12, 3
      %p151 = pnand %p149, %p150
      %p152 = pneg %p151
      // Predicated region
      $region9: #{tpu_custom_call.1} parent=5 // pred_check
        _
      $region10: #{tpu_custom_call.1} parent=5 // pred_check_branch
        %154 = sbr.rel (%p151) target = $region12
      $region11: #{tpu_custom_call.1} parent=5 // pred_region
        %s155 = ssub.s32 %s12, 1
        // Predicated region
        $region13: #{tpu_custom_call.1} parent=11 // pred_check
          %p156 = pneg %p87
        $region14: #{tpu_custom_call.1} parent=11 // pred_check_branch
          %158 = sbr.rel (%p156) target = $region16
        $region15: #{tpu_custom_call.1} parent=11 // pred_region
          %s159 = smul.u32 9, %s24
          %s160 = smul.u32 2, %s23
          %p161 = scmp.lt.s32.totalorder %s159, 8
          %s162 = scalar_select %p161, %s159, 8
          %p163 = scmp.lt.s32.totalorder %s160, 1
          %s164 = scalar_select %p163, %s160, 1
          %s165 = smul.addr %s162, 2
          %s166 = sadd.s32 %s164, %s165
          %s167 = smul.addr %s166, 8
          %s168 = scalar_lea.vmem %s1, %s167
          %s169 = smul.u32 9, %s24
          %s170 = smul.u32 2, %s23
        $region16: #{tpu_custom_call.1} parent=11 // pred_fallthru
          _
        // Predicated region
        $region17: #{tpu_custom_call.1} parent=11 // pred_check
          %p171 = pneg %p113
        $region18: #{tpu_custom_call.1} parent=11 // pred_check_branch
          %173 = sbr.rel (%p171) target = $region20
        $region19: #{tpu_custom_call.1} parent=11 // pred_region
          %s174 = smul.u32 2, %s23
          %p175 = scmp.lt.s32.totalorder %s174, 1
          %s176 = scalar_select %p175, %s174, 1
          %s177 = scalar_lea.vmem %s2, %s176
          %s178 = smul.u32 2, %s23
        $region20: #{tpu_custom_call.1} parent=11 // pred_fallthru
          _
      $region12: #{tpu_custom_call.1} parent=5 // pred_fallthru
        _
      %p179 = scmp.lt.s32.totalorder %s12, 2
      // Predicated region
      $region21: #{tpu_custom_call.1} parent=5 // pred_check
        %p180 = pneg %p179
      $region22: #{tpu_custom_call.1} parent=5 // pred_check_branch
        %182 = sbr.rel (%p180) target = $region24
      $region23: #{tpu_custom_call.1} parent=5 // pred_region
        // Predicated region
        $region25: #{tpu_custom_call.1} parent=23 // pred_check
          %p183 = pneg %p53
        $region26: #{tpu_custom_call.1} parent=23 // pred_check_branch
          %185 = sbr.rel (%p183) target = $region28
        $region27: #{tpu_custom_call.1} parent=23 // pred_region
          %s186 = smul.u32 32, %s19
          %s187 = ssub.s32 49, %s186
          %p188 = scmp.lt.s32.totalorder %s187, 32
          %s189 = scalar_select %p188, %s187, 32
          %s190 = smul.u32 128, %s189
          %p191 = scmp.lt.s32.totalorder %s186, 48
          %s192 = scalar_select %p191, %s186, 48
          %p193 = scmp.lt.s32.totalorder %s21, 0
          %s194 = scalar_select %p193, %s21, 0
          %s195 = sadd.s32 %s194, %s192
          %s196 = smul.addr %s195, 8
          %s197 = scalar_lea.vmem %s0, %s196
          %s198 = smul.u32 32, %s19
          %s199 = ssub.s32 49, %s198
          %p200 = scmp.lt.s32.totalorder %s199, 32
          %s201 = scalar_select %p200, %s199, 32
          %s202 = smul.u32 128, %s201
        $region28: #{tpu_custom_call.1} parent=23 // pred_fallthru
          _
      $region24: #{tpu_custom_call.1} parent=5 // pred_fallthru
        _
      %p203 = scmp.le.s32.totalorder 1, %s12
      %p204 = scmp.lt.s32.totalorder %s12, 3
      %p205 = pnand %p203, %p204
      %p206 = pneg %p205
      // Predicated region
      $region29: #{tpu_custom_call.1} parent=5 // pred_check
        _
      $region30: #{tpu_custom_call.1} parent=5 // pred_check_branch
        %208 = sbr.rel (%p205) target = $region32
      $region31: #{tpu_custom_call.1} parent=5 // pred_region
        %s209 = ssub.s32 %s12, 1
        %s210 = smul.u32 32, %s22
        %s211 = ssub.s32 49, %s210
        %p212 = scmp.lt.s32.totalorder %s211, 32
        %s213 = scalar_select %p212, %s211, 32
        %s214 = smul.u32 128, %s213
        %p215 = scmp.lt.s32.totalorder %s210, 48
        %s216 = scalar_select %p215, %s210, 48
        %p217 = scmp.lt.s32.totalorder %s24, 0
        %s218 = scalar_select %p217, %s24, 0
        %s219 = sadd.s32 %s218, %s216
        %s220 = smul.addr %s219, 8
        %s221 = scalar_lea.vmem %s0, %s220
        %p222 = pneg %p59
        %p223 = pneg %p56
        %s224 = smul.u32 9, %s24
        %s225 = smul.u32 2, %s23
        %p226 = scmp.lt.s32.totalorder %s224, 8
        %s227 = scalar_select %p226, %s224, 8
        %p228 = scmp.lt.s32.totalorder %s225, 1
        %s229 = scalar_select %p228, %s225, 1
        %s230 = smul.addr %s227, 2
        %s231 = sadd.s32 %s229, %s230
        %s232 = smul.addr %s231, 8
        %s233 = scalar_lea.vmem %s1, %s232
        %p234 = pneg %p87
        %p235 = pneg %p84
        %s236 = smul.u32 2, %s23
        %p237 = scmp.lt.s32.totalorder %s236, 1
        %s238 = scalar_select %p237, %s236, 1
        %s239 = scalar_lea.vmem %s2, %s238
        %p240 = pneg %p113
        %p241 = pneg %p110
        %p242 = pneg %p141
        %p243 = pneg %p138
        %s244 = sand.u32 %s128, 1
        %s245 = scalar_lea.sflag [#allocation4], %s244
        %s246 = sand.u32 %s128, 1
        %s247 = smul.addr %s246, 512
        %s248 = scalar_lea.vmem [#allocation3], %s247
        %s249 = smul.u32 32, %s22
        %s250 = ssub.s32 49, %s249
        %p251 = scmp.lt.s32.totalorder %s250, 32
        %s252 = scalar_select %p251, %s250, 32
        %s253 = smul.u32 128, %s252
        %p254 = scmp.lt.s32.totalorder %s249, 48
        %s255 = scalar_select %p254, %s249, 48
        %p256 = scmp.lt.s32.totalorder %s24, 0
        %s257 = scalar_select %p256, %s24, 0
        %s258 = sadd.s32 %s257, %s255
        %s259 = smul.addr %s258, 8
        %s260 = scalar_lea.vmem %s0, %s259
        %s261 = smul.u32 32, %s22
        %s262 = ssub.s32 49, %s261
        %p263 = scmp.lt.s32.totalorder %s262, 32
        %s264 = scalar_select %p263, %s262, 32
        %s265 = smul.u32 128, %s264
        %s266 = smul.u32 9, %s24
        %s267 = smul.u32 2, %s23
        %p268 = scmp.lt.s32.totalorder %s266, 8
        %s269 = scalar_select %p268, %s266, 8
        %p270 = scmp.lt.s32.totalorder %s267, 1
        %s271 = scalar_select %p270, %s267, 1
        %s272 = smul.addr %s269, 2
        %s273 = sadd.s32 %s271, %s272
        %s274 = smul.addr %s273, 8
        %s275 = scalar_lea.vmem %s1, %s274
        %s276 = smul.u32 9, %s24
        %s277 = smul.u32 2, %s23
        %s278 = smul.u32 2, %s23
        %p279 = scmp.lt.s32.totalorder %s278, 1
        %s280 = scalar_select %p279, %s278, 1
        %s281 = scalar_lea.vmem %s2, %s280
        %s282 = smul.u32 2, %s23
        %s283 = smul.u32 32, %s22
        %s284 = smul.u32 2, %s23
        %s285 = ssub.s32 49, %s283
        %p286 = scmp.lt.s32.totalorder %s285, 32
        %s287 = scalar_select %p286, %s285, 32
        %s288 = smul.u32 128, %s287
        %s289 = smul.u32 %s288, 2
        %p290 = scmp.eq.s32.totalorder %s24, 0
        // Predicated region
        $region33: #{tpu_custom_call.1} parent=31 // pred_check
          %p291 = pneg %p290
        $region34: #{tpu_custom_call.1} parent=31 // pred_check_branch
          %293 = sbr.rel (%p291) target = $region36
        $region35: #{tpu_custom_call.1} parent=31 // pred_region
          %294 = vst [vmem:[#allocation2] sm:$0xff] 0.0
          %295 = vst [vmem:[#allocation2 + $0x8] sm:$0xff] 0.0
          %296 = vst [vmem:[#allocation2 + $0x10] sm:$0xff] 0.0
          %297 = vst [vmem:[#allocation2 + $0x18] sm:$0xff] 0.0
          %298 = vst [vmem:[#allocation2 + $0x20] sm:$0xff] 0.0
          %299 = vst [vmem:[#allocation2 + $0x28] sm:$0xff] 0.0
          %300 = vst [vmem:[#allocation2 + $0x30] sm:$0xff] 0.0
          %301 = vst [vmem:[#allocation2 + $0x38] sm:$0xff] 0.0
          %302 = vst [vmem:[#allocation2 + $0x40] sm:$0xff] 0.0
          %303 = vst [vmem:[#allocation2 + $0x48] sm:$0xff] 0.0
          %304 = vst [vmem:[#allocation2 + $0x50] sm:$0xff] 0.0
          %305 = vst [vmem:[#allocation2 + $0x58] sm:$0xff] 0.0
          %306 = vst [vmem:[#allocation2 + $0x60] sm:$0xff] 0.0
          %307 = vst [vmem:[#allocation2 + $0x68] sm:$0xff] 0.0
          %308 = vst [vmem:[#allocation2 + $0x70] sm:$0xff] 0.0
          %309 = vst [vmem:[#allocation2 + $0x78] sm:$0xff] 0.0
          %310 = vst [vmem:[#allocation2 + $0x80] sm:$0xff] 0.0
          %311 = vst [vmem:[#allocation2 + $0x88] sm:$0xff] 0.0
          %312 = vst [vmem:[#allocation2 + $0x90] sm:$0xff] 0.0
          %313 = vst [vmem:[#allocation2 + $0x98] sm:$0xff] 0.0
          %314 = vst [vmem:[#allocation2 + $0xa0] sm:$0xff] 0.0
          %315 = vst [vmem:[#allocation2 + $0xa8] sm:$0xff] 0.0
          %316 = vst [vmem:[#allocation2 + $0xb0] sm:$0xff] 0.0
          %317 = vst [vmem:[#allocation2 + $0xb8] sm:$0xff] 0.0
          %318 = vst [vmem:[#allocation2 + $0xc0] sm:$0xff] 0.0
          %319 = vst [vmem:[#allocation2 + $0xc8] sm:$0xff] 0.0
          %320 = vst [vmem:[#allocation2 + $0xd0] sm:$0xff] 0.0
          %321 = vst [vmem:[#allocation2 + $0xd8] sm:$0xff] 0.0
          %322 = vst [vmem:[#allocation2 + $0xe0] sm:$0xff] 0.0
          %323 = vst [vmem:[#allocation2 + $0xe8] sm:$0xff] 0.0
          %324 = vst [vmem:[#allocation2 + $0xf0] sm:$0xff] 0.0
          %325 = vst [vmem:[#allocation2 + $0xf8] sm:$0xff] 0.0
          %326 = vst [vmem:[#allocation2 + $0x100] sm:$0xff] 0.0
          %327 = vst [vmem:[#allocation2 + $0x108] sm:$0xff] 0.0
          %328 = vst [vmem:[#allocation2 + $0x110] sm:$0xff] 0.0
          %329 = vst [vmem:[#allocation2 + $0x118] sm:$0xff] 0.0
          %330 = vst [vmem:[#allocation2 + $0x120] sm:$0xff] 0.0
          %331 = vst [vmem:[#allocation2 + $0x128] sm:$0xff] 0.0
          %332 = vst [vmem:[#allocation2 + $0x130] sm:$0xff] 0.0
          %333 = vst [vmem:[#allocation2 + $0x138] sm:$0xff] 0.0
          %334 = vst [vmem:[#allocation2 + $0x140] sm:$0xff] 0.0
          %335 = vst [vmem:[#allocation2 + $0x148] sm:$0xff] 0.0
          %336 = vst [vmem:[#allocation2 + $0x150] sm:$0xff] 0.0
          %337 = vst [vmem:[#allocation2 + $0x158] sm:$0xff] 0.0
          %338 = vst [vmem:[#allocation2 + $0x160] sm:$0xff] 0.0
          %339 = vst [vmem:[#allocation2 + $0x168] sm:$0xff] 0.0
          %340 = vst [vmem:[#allocation2 + $0x170] sm:$0xff] 0.0
          %341 = vst [vmem:[#allocation2 + $0x178] sm:$0xff] 0.0
          %342 = vst [vmem:[#allocation2 + $0x180] sm:$0xff] 0.0
          %343 = vst [vmem:[#allocation2 + $0x188] sm:$0xff] 0.0
          %344 = vst [vmem:[#allocation2 + $0x190] sm:$0xff] 0.0
          %345 = vst [vmem:[#allocation2 + $0x198] sm:$0xff] 0.0
          %346 = vst [vmem:[#allocation2 + $0x1a0] sm:$0xff] 0.0
          %347 = vst [vmem:[#allocation2 + $0x1a8] sm:$0xff] 0.0
          %348 = vst [vmem:[#allocation2 + $0x1b0] sm:$0xff] 0.0
          %349 = vst [vmem:[#allocation2 + $0x1b8] sm:$0xff] 0.0
          %350 = vst [vmem:[#allocation2 + $0x1c0] sm:$0xff] 0.0
          %351 = vst [vmem:[#allocation2 + $0x1c8] sm:$0xff] 0.0
          %352 = vst [vmem:[#allocation2 + $0x1d0] sm:$0xff] 0.0
          %353 = vst [vmem:[#allocation2 + $0x1d8] sm:$0xff] 0.0
          %354 = vst [vmem:[#allocation2 + $0x1e0] sm:$0xff] 0.0
          %355 = vst [vmem:[#allocation2 + $0x1e8] sm:$0xff] 0.0
          %356 = vst [vmem:[#allocation2 + $0x1f0] sm:$0xff] 0.0
          %357 = vst [vmem:[#allocation2 + $0x1f8] sm:$0xff] 0.0
        $region36: #{tpu_custom_call.1} parent=31 // pred_fallthru
          _
        %v358 = vld [vmem:[#allocation2] sm:$0xff]
        %v359 = vld [vmem:[#allocation2 + $0x8] sm:$0xff]
        %v360 = vld [vmem:[#allocation2 + $0x10] sm:$0xff]
        %v361 = vld [vmem:[#allocation2 + $0x18] sm:$0xff]
        %v362 = vld [vmem:[#allocation2 + $0x20] sm:$0xff]
        %v363 = vld [vmem:[#allocation2 + $0x28] sm:$0xff]
        %v364 = vld [vmem:[#allocation2 + $0x30] sm:$0xff]
        %v365 = vld [vmem:[#allocation2 + $0x38] sm:$0xff]
        %v366 = vld [vmem:[#allocation2 + $0x40] sm:$0xff]
        %v367 = vld [vmem:[#allocation2 + $0x48] sm:$0xff]
        %v368 = vld [vmem:[#allocation2 + $0x50] sm:$0xff]
        %v369 = vld [vmem:[#allocation2 + $0x58] sm:$0xff]
        %v370 = vld [vmem:[#allocation2 + $0x60] sm:$0xff]
        %v371 = vld [vmem:[#allocation2 + $0x68] sm:$0xff]
        %v372 = vld [vmem:[#allocation2 + $0x70] sm:$0xff]
        %v373 = vld [vmem:[#allocation2 + $0x78] sm:$0xff]
        %v374 = vld [vmem:[#allocation2 + $0x80] sm:$0xff]
        %v375 = vld [vmem:[#allocation2 + $0x88] sm:$0xff]
        %v376 = vld [vmem:[#allocation2 + $0x90] sm:$0xff]
        %v377 = vld [vmem:[#allocation2 + $0x98] sm:$0xff]
        %v378 = vld [vmem:[#allocation2 + $0xa0] sm:$0xff]
        %v379 = vld [vmem:[#allocation2 + $0xa8] sm:$0xff]
        %v380 = vld [vmem:[#allocation2 + $0xb0] sm:$0xff]
        %v381 = vld [vmem:[#allocation2 + $0xb8] sm:$0xff]
        %v382 = vld [vmem:[#allocation2 + $0xc0] sm:$0xff]
        %v383 = vld [vmem:[#allocation2 + $0xc8] sm:$0xff]
        %v384 = vld [vmem:[#allocation2 + $0xd0] sm:$0xff]
        %v385 = vld [vmem:[#allocation2 + $0xd8] sm:$0xff]
        %v386 = vld [vmem:[#allocation2 + $0xe0] sm:$0xff]
        %v387 = vld [vmem:[#allocation2 + $0xe8] sm:$0xff]
        %v388 = vld [vmem:[#allocation2 + $0xf0] sm:$0xff]
        %v389 = vld [vmem:[#allocation2 + $0xf8] sm:$0xff]
        %v390 = vld [vmem:[#allocation2 + $0x100] sm:$0xff]
        %v391 = vld [vmem:[#allocation2 + $0x108] sm:$0xff]
        %v392 = vld [vmem:[#allocation2 + $0x110] sm:$0xff]
        %v393 = vld [vmem:[#allocation2 + $0x118] sm:$0xff]
        %v394 = vld [vmem:[#allocation2 + $0x120] sm:$0xff]
        %v395 = vld [vmem:[#allocation2 + $0x128] sm:$0xff]
        %v396 = vld [vmem:[#allocation2 + $0x130] sm:$0xff]
        %v397 = vld [vmem:[#allocation2 + $0x138] sm:$0xff]
        %v398 = vld [vmem:[#allocation2 + $0x140] sm:$0xff]
        %v399 = vld [vmem:[#allocation2 + $0x148] sm:$0xff]
        %v400 = vld [vmem:[#allocation2 + $0x150] sm:$0xff]
        %v401 = vld [vmem:[#allocation2 + $0x158] sm:$0xff]
        %v402 = vld [vmem:[#allocation2 + $0x160] sm:$0xff]
        %v403 = vld [vmem:[#allocation2 + $0x168] sm:$0xff]
        %v404 = vld [vmem:[#allocation2 + $0x170] sm:$0xff]
        %v405 = vld [vmem:[#allocation2 + $0x178] sm:$0xff]
        %v406 = vld [vmem:[#allocation2 + $0x180] sm:$0xff]
        %v407 = vld [vmem:[#allocation2 + $0x188] sm:$0xff]
        %v408 = vld [vmem:[#allocation2 + $0x190] sm:$0xff]
        %v409 = vld [vmem:[#allocation2 + $0x198] sm:$0xff]
        %v410 = vld [vmem:[#allocation2 + $0x1a0] sm:$0xff]
        %v411 = vld [vmem:[#allocation2 + $0x1a8] sm:$0xff]
        %v412 = vld [vmem:[#allocation2 + $0x1b0] sm:$0xff]
        %v413 = vld [vmem:[#allocation2 + $0x1b8] sm:$0xff]
        %v414 = vld [vmem:[#allocation2 + $0x1c0] sm:$0xff]
        %v415 = vld [vmem:[#allocation2 + $0x1c8] sm:$0xff]
        %v416 = vld [vmem:[#allocation2 + $0x1d0] sm:$0xff]
        %v417 = vld [vmem:[#allocation2 + $0x1d8] sm:$0xff]
        %v418 = vld [vmem:[#allocation2 + $0x1e0] sm:$0xff]
        %v419 = vld [vmem:[#allocation2 + $0x1e8] sm:$0xff]
        %v420 = vld [vmem:[#allocation2 + $0x1f0] sm:$0xff]
        %v421 = vld [vmem:[#allocation2 + $0x1f8] sm:$0xff]
        %v422 = vld [vmem:[%s260] sm:$0xff]
        %v423 = vld [vmem:[%s260 + $0x8] sm:$0xff]
        %v424 = vld [vmem:[%s260 + $0x10] sm:$0xff]
        %v425 = vld [vmem:[%s260 + $0x18] sm:$0xff]
        %v426 = vld [vmem:[%s260 + $0x20] sm:$0xff]
        %v427 = vld [vmem:[%s260 + $0x28] sm:$0xff]
        %v428 = vld [vmem:[%s260 + $0x30] sm:$0xff]
        %v429 = vld [vmem:[%s260 + $0x38] sm:$0xff]
        %v430 = vld [vmem:[%s260 + $0x40] sm:$0xff]
        %v431 = vld [vmem:[%s260 + $0x48] sm:$0xff]
        %v432 = vld [vmem:[%s260 + $0x50] sm:$0xff]
        %v433 = vld [vmem:[%s260 + $0x58] sm:$0xff]
        %v434 = vld [vmem:[%s260 + $0x60] sm:$0xff]
        %v435 = vld [vmem:[%s260 + $0x68] sm:$0xff]
        %v436 = vld [vmem:[%s260 + $0x70] sm:$0xff]
        %v437 = vld [vmem:[%s260 + $0x78] sm:$0xff]
        %v438 = vld [vmem:[%s260 + $0x80] sm:$0xff]
        %v439 = vld [vmem:[%s260 + $0x88] sm:$0xff]
        %v440 = vld [vmem:[%s260 + $0x90] sm:$0xff]
        %v441 = vld [vmem:[%s260 + $0x98] sm:$0xff]
        %v442 = vld [vmem:[%s260 + $0xa0] sm:$0xff]
        %v443 = vld [vmem:[%s260 + $0xa8] sm:$0xff]
        %v444 = vld [vmem:[%s260 + $0xb0] sm:$0xff]
        %v445 = vld [vmem:[%s260 + $0xb8] sm:$0xff]
        %v446 = vld [vmem:[%s260 + $0xc0] sm:$0xff]
        %v447 = vld [vmem:[%s260 + $0xc8] sm:$0xff]
        %v448 = vld [vmem:[%s260 + $0xd0] sm:$0xff]
        %v449 = vld [vmem:[%s260 + $0xd8] sm:$0xff]
        %v450 = vld [vmem:[%s260 + $0xe0] sm:$0xff]
        %v451 = vld [vmem:[%s260 + $0xe8] sm:$0xff]
        %v452 = vld [vmem:[%s260 + $0xf0] sm:$0xff]
        %v453 = vld [vmem:[%s260 + $0xf8] sm:$0xff]
        %v454 = vld [vmem:[%s275] sm:$0xff]
        %v455 = vld [vmem:[%s275 + $0x8] sm:$0xff]
        %v456 = vld [vmem:[%s275 + $0x10] sm:$0xff]
        %v457 = vld [vmem:[%s275 + $0x18] sm:$0xff]
        %v458 = vld [vmem:[%s275 + $0x20] sm:$0xff]
        %v459 = vld [vmem:[%s275 + $0x28] sm:$0xff]
        %v460 = vld [vmem:[%s275 + $0x30] sm:$0xff]
        %v461 = vld [vmem:[%s275 + $0x38] sm:$0xff]
        %v462 = vld [vmem:[%s275 + $0x40] sm:$0xff]
        %v463 = vld [vmem:[%s275 + $0x48] sm:$0xff]
        %v464 = vld [vmem:[%s275 + $0x50] sm:$0xff]
        %v465 = vld [vmem:[%s275 + $0x58] sm:$0xff]
        %v466 = vld [vmem:[%s275 + $0x60] sm:$0xff]
        %v467 = vld [vmem:[%s275 + $0x68] sm:$0xff]
        %v468 = vld [vmem:[%s275 + $0x70] sm:$0xff]
        %v469 = vld [vmem:[%s275 + $0x78] sm:$0xff]
        %v470 = vld [vmem:[%s275 + $0x80] sm:$0xff]
        %v471 = vld [vmem:[%s275 + $0x88] sm:$0xff]
        %vm472 = vcmask 588800
        %v474 = vsel %vm472, %v422, 0
        %v477 = vsel %vm472, %v423, 0
        %v480 = vsel %vm472, %v424, 0
        %v483 = vsel %vm472, %v425, 0
        %v486 = vsel %vm472, %v426, 0
        %v489 = vsel %vm472, %v427, 0
        %v492 = vsel %vm472, %v428, 0
        %v495 = vsel %vm472, %v429, 0
        %v498 = vsel %vm472, %v430, 0
        %v501 = vsel %vm472, %v431, 0
        %v504 = vsel %vm472, %v432, 0
        %v507 = vsel %vm472, %v433, 0
        %v510 = vsel %vm472, %v434, 0
        %v513 = vsel %vm472, %v435, 0
        %v516 = vsel %vm472, %v436, 0
        %v519 = vsel %vm472, %v437, 0
        %v522 = vsel %vm472, %v438, 0
        %v525 = vsel %vm472, %v439, 0
        %v528 = vsel %vm472, %v440, 0
        %v531 = vsel %vm472, %v441, 0
        %v534 = vsel %vm472, %v442, 0
        %v537 = vsel %vm472, %v443, 0
        %v540 = vsel %vm472, %v444, 0
        %v543 = vsel %vm472, %v445, 0
        %v546 = vsel %vm472, %v446, 0
        %v549 = vsel %vm472, %v447, 0
        %v552 = vsel %vm472, %v448, 0
        %v555 = vsel %vm472, %v449, 0
        %v558 = vsel %vm472, %v450, 0
        %v561 = vsel %vm472, %v451, 0
        %v564 = vsel %vm472, %v452, 0
        %v567 = vsel %vm472, %v453, 0
        %569 = vmatprep.subr.mxu0 %v455
        %570 = vmatpush1.msra.mxu0 %v454
        %571 = vmatprep.subr.mxu0 %v457
        %572 = vmatpush1.msra.mxu0 %v456
        %573 = vmatprep.subr.mxu0 %v459
        %574 = vmatpush1.msra.mxu0 %v458
        %575 = vmatprep.subr.mxu0 %v461
        %576 = vmatpush1.msra.mxu0 %v460
        %577 = vmatprep.subr.mxu0 %v463
        %578 = vmatpush1.msra.mxu0 %v462
        %579 = vmatprep.subr.mxu0 %v465
        %580 = vmatpush1.msra.mxu0 %v464
        %581 = vmatprep.subr.mxu0 %v467
        %582 = vmatpush1.msra.mxu0 %v466
        %583 = vmatprep.subr.mxu0 %v469
        %584 = vmatpush1.msra.mxu0 %v468
        %585 = vmatprep.subr.mxu0 %v471
        %586 = vmatpush1.msra.mxu0 %v470
        %587 = vmatprep.subr.mxu0 0.0
        %588 = vmatpush1.msra.mxu0 0.0
        %589 = vmatprep.subr.mxu0 0.0
        %590 = vmatpush1.msra.mxu0 0.0
        %591 = vmatprep.subr.mxu0 0.0
        %592 = vmatpush1.msra.mxu0 0.0
        %593 = vmatprep.subr.mxu0 0.0
        %594 = vmatpush1.msra.mxu0 0.0
        %595 = vmatprep.subr.mxu0 0.0
        %596 = vmatpush1.msra.mxu0 0.0
        %597 = vmatprep.subr.mxu0 0.0
        %598 = vmatpush1.msra.mxu0 0.0
        %599 = vmatprep.subr.mxu0 0.0
        %600 = vmatpush1.msra.mxu0 0.0
        %601 = vmatprep.subr.mxu0 0.0
        %602 = vmatpush1.msra.mxu0 0.0
        %603 = vmatprep.subr.mxu0 0.0
        %604 = vmatpush1.msra.mxu0 0.0
        %605 = vmatprep.subr.mxu0 0.0
        %606 = vmatpush1.msra.mxu0 0.0
        %607 = vmatprep.subr.mxu0 0.0
        %608 = vmatpush1.msra.mxu0 0.0
        %609 = vmatprep.subr.mxu0 0.0
        %610 = vmatpush1.msra.mxu0 0.0
        %611 = vmatprep.subr.mxu0 0.0
        %612 = vmatpush1.msra.mxu0 0.0
        %613 = vmatprep.subr.mxu0 0.0
        %614 = vmatpush1.msra.mxu0 0.0
        %615 = vmatprep.subr.mxu0 0.0
        %616 = vmatpush1.msra.mxu0 0.0
        %617 = vmatprep.subr.mxu0 0.0
        %618 = vmatpush1.msra.mxu0 0.0
        %619 = vmatprep.subr.mxu0 0.0
        %620 = vmatpush1.msra.mxu0 0.0
        %621 = vmatprep.subr.mxu0 0.0
        %622 = vmatpush1.msra.mxu0 0.0
        %623 = vmatprep.subr.mxu0 0.0
        %624 = vmatpush1.msra.mxu0 0.0
        %625 = vmatprep.subr.mxu0 0.0
        %626 = vmatpush1.msra.mxu0 0.0
        %627 = vmatprep.subr.mxu0 0.0
        %628 = vmatpush1.msra.mxu0 0.0
        %629 = vmatprep.subr.mxu0 0.0
        %630 = vmatpush1.msra.mxu0 0.0
        %631 = vmatprep.subr.mxu0 0.0
        %632 = vmatpush1.msra.mxu0 0.0
        %633 = vmatprep.mubr.f32.mxu0 0.0
        %634 = vmatmul.mubr.f32.gmra.mrb[0].mxu0 %v474
        %v635 = vpop.f32.mrb[0].mxu0
        %v636 = vadd.f32 0.0, %v635
        %v637 = vpop.f32.mrb[0].mxu0
        %v638 = vadd.f32 0.0, %v637
        %639 = vmatprep.mubr.f32.mxu0 0.0
        %640 = vmatmul.mubr.f32.gmra.mrb[0].mxu0 %v477
        %v641 = vpop.f32.mrb[0].mxu0
        %v642 = vadd.f32 0.0, %v641
        %v643 = vpop.f32.mrb[0].mxu0
        %v644 = vadd.f32 0.0, %v643
        %645 = vmatprep.mubr.f32.mxu0 0.0
        %646 = vmatmul.mubr.f32.gmra.mrb[0].mxu0 %v480
        %v647 = vpop.f32.mrb[0].mxu0
        %v648 = vadd.f32 0.0, %v647
        %v649 = vpop.f32.mrb[0].mxu0
        %v650 = vadd.f32 0.0, %v649
        %651 = vmatprep.mubr.f32.mxu0 0.0
        %652 = vmatmul.mubr.f32.gmra.mrb[0].mxu0 %v483
        %v653 = vpop.f32.mrb[0].mxu0
        %v654 = vadd.f32 0.0, %v653
        %v655 = vpop.f32.mrb[0].mxu0
        %v656 = vadd.f32 0.0, %v655
        %657 = vmatprep.mubr.f32.mxu0 0.0
        %658 = vmatmul.mubr.f32.gmra.mrb[0].mxu0 %v486
        %v659 = vpop.f32.mrb[0].mxu0
        %v660 = vadd.f32 0.0, %v659
        %v661 = vpop.f32.mrb[0].mxu0
        %v662 = vadd.f32 0.0, %v661
        %663 = vmatprep.mubr.f32.mxu0 0.0
        %664 = vmatmul.mubr.f32.gmra.mrb[0].mxu0 %v489
        %v665 = vpop.f32.mrb[0].mxu0
        %v666 = vadd.f32 0.0, %v665
        %v667 = vpop.f32.mrb[0].mxu0
        %v668 = vadd.f32 0.0, %v667
        %669 = vmatprep.mubr.f32.mxu0 0.0
        %670 = vmatmul.mubr.f32.gmra.mrb[0].mxu0 %v492
        %v671 = vpop.f32.mrb[0].mxu0
        %v672 = vadd.f32 0.0, %v671
        %v673 = vpop.f32.mrb[0].mxu0
        %v674 = vadd.f32 0.0, %v673
        %675 = vmatprep.mubr.f32.mxu0 0.0
        %676 = vmatmul.mubr.f32.gmra.mrb[0].mxu0 %v495
        %v677 = vpop.f32.mrb[0].mxu0
        %v678 = vadd.f32 0.0, %v677
        %v679 = vpop.f32.mrb[0].mxu0
        %v680 = vadd.f32 0.0, %v679
        %681 = vmatprep.mubr.f32.mxu0 0.0
        %682 = vmatmul.mubr.f32.gmra.mrb[0].mxu0 %v498
        %v683 = vpop.f32.mrb[0].mxu0
        %v684 = vadd.f32 0.0, %v683
        %v685 = vpop.f32.mrb[0].mxu0
        %v686 = vadd.f32 0.0, %v685
        %687 = vmatprep.mubr.f32.mxu0 0.0
        %688 = vmatmul.mubr.f32.gmra.mrb[0].mxu0 %v501
        %v689 = vpop.f32.mrb[0].mxu0
        %v690 = vadd.f32 0.0, %v689
        %v691 = vpop.f32.mrb[0].mxu0
        %v692 = vadd.f32 0.0, %v691
        %693 = vmatprep.mubr.f32.mxu0 0.0
        %694 = vmatmul.mubr.f32.gmra.mrb[0].mxu0 %v504
        %v695 = vpop.f32.mrb[0].mxu0
        %v696 = vadd.f32 0.0, %v695
        %v697 = vpop.f32.mrb[0].mxu0
        %v698 = vadd.f32 0.0, %v697
        %699 = vmatprep.mubr.f32.mxu0 0.0
        %700 = vmatmul.mubr.f32.gmra.mrb[0].mxu0 %v507
        %v701 = vpop.f32.mrb[0].mxu0
        %v702 = vadd.f32 0.0, %v701
        %v703 = vpop.f32.mrb[0].mxu0
        %v704 = vadd.f32 0.0, %v703
        %705 = vmatprep.mubr.f32.mxu0 0.0
        %706 = vmatmul.mubr.f32.gmra.mrb[0].mxu0 %v510
        %v707 = vpop.f32.mrb[0].mxu0
        %v708 = vadd.f32 0.0, %v707
        %v709 = vpop.f32.mrb[0].mxu0
        %v710 = vadd.f32 0.0, %v709
        %711 = vmatprep.mubr.f32.mxu0 0.0
        %712 = vmatmul.mubr.f32.gmra.mrb[0].mxu0 %v513
        %v713 = vpop.f32.mrb[0].mxu0
        %v714 = vadd.f32 0.0, %v713
        %v715 = vpop.f32.mrb[0].mxu0
        %v716 = vadd.f32 0.0, %v715
        %717 = vmatprep.mubr.f32.mxu0 0.0
        %718 = vmatmul.mubr.f32.gmra.mrb[0].mxu0 %v516
        %v719 = vpop.f32.mrb[0].mxu0
        %v720 = vadd.f32 0.0, %v719
        %v721 = vpop.f32.mrb[0].mxu0
        %v722 = vadd.f32 0.0, %v721
        %723 = vmatprep.mubr.f32.mxu0 0.0
        %724 = vmatmul.mubr.f32.gmra.mrb[0].mxu0 %v519
        %v725 = vpop.f32.mrb[0].mxu0
        %v726 = vadd.f32 0.0, %v725
        %v727 = vpop.f32.mrb[0].mxu0
        %v728 = vadd.f32 0.0, %v727
        %729 = vmatprep.mubr.f32.mxu0 0.0
        %730 = vmatmul.mubr.f32.gmra.mrb[0].mxu0 %v522
        %v731 = vpop.f32.mrb[0].mxu0
        %v732 = vadd.f32 0.0, %v731
        %v733 = vpop.f32.mrb[0].mxu0
        %v734 = vadd.f32 0.0, %v733
        %735 = vmatprep.mubr.f32.mxu0 0.0
        %736 = vmatmul.mubr.f32.gmra.mrb[0].mxu0 %v525
        %v737 = vpop.f32.mrb[0].mxu0
        %v738 = vadd.f32 0.0, %v737
        %v739 = vpop.f32.mrb[0].mxu0
        %v740 = vadd.f32 0.0, %v739
        %741 = vmatprep.mubr.f32.mxu0 0.0
        %742 = vmatmul.mubr.f32.gmra.mrb[0].mxu0 %v528
        %v743 = vpop.f32.mrb[0].mxu0
        %v744 = vadd.f32 0.0, %v743
        %v745 = vpop.f32.mrb[0].mxu0
        %v746 = vadd.f32 0.0, %v745
        %747 = vmatprep.mubr.f32.mxu0 0.0
        %748 = vmatmul.mubr.f32.gmra.mrb[0].mxu0 %v531
        %v749 = vpop.f32.mrb[0].mxu0
        %v750 = vadd.f32 0.0, %v749
        %v751 = vpop.f32.mrb[0].mxu0
        %v752 = vadd.f32 0.0, %v751
        %753 = vmatprep.mubr.f32.mxu0 0.0
        %754 = vmatmul.mubr.f32.gmra.mrb[0].mxu0 %v534
        %v755 = vpop.f32.mrb[0].mxu0
        %v756 = vadd.f32 0.0, %v755
        %v757 = vpop.f32.mrb[0].mxu0
        %v758 = vadd.f32 0.0, %v757
        %759 = vmatprep.mubr.f32.mxu0 0.0
        %760 = vmatmul.mubr.f32.gmra.mrb[0].mxu0 %v537
        %v761 = vpop.f32.mrb[0].mxu0
        %v762 = vadd.f32 0.0, %v761
        %v763 = vpop.f32.mrb[0].mxu0
        %v764 = vadd.f32 0.0, %v763
        %765 = vmatprep.mubr.f32.mxu0 0.0
        %766 = vmatmul.mubr.f32.gmra.mrb[0].mxu0 %v540
        %v767 = vpop.f32.mrb[0].mxu0
        %v768 = vadd.f32 0.0, %v767
        %v769 = vpop.f32.mrb[0].mxu0
        %v770 = vadd.f32 0.0, %v769
        %771 = vmatprep.mubr.f32.mxu0 0.0
        %772 = vmatmul.mubr.f32.gmra.mrb[0].mxu0 %v543
        %v773 = vpop.f32.mrb[0].mxu0
        %v774 = vadd.f32 0.0, %v773
        %v775 = vpop.f32.mrb[0].mxu0
        %v776 = vadd.f32 0.0, %v775
        %777 = vmatprep.mubr.f32.mxu0 0.0
        %778 = vmatmul.mubr.f32.gmra.mrb[0].mxu0 %v546
        %v779 = vpop.f32.mrb[0].mxu0
        %v780 = vadd.f32 0.0, %v779
        %v781 = vpop.f32.mrb[0].mxu0
        %v782 = vadd.f32 0.0, %v781
        %783 = vmatprep.mubr.f32.mxu0 0.0
        %784 = vmatmul.mubr.f32.gmra.mrb[0].mxu0 %v549
        %v785 = vpop.f32.mrb[0].mxu0
        %v786 = vadd.f32 0.0, %v785
        %v787 = vpop.f32.mrb[0].mxu0
        %v788 = vadd.f32 0.0, %v787
        %789 = vmatprep.mubr.f32.mxu0 0.0
        %790 = vmatmul.mubr.f32.gmra.mrb[0].mxu0 %v552
        %v791 = vpop.f32.mrb[0].mxu0
        %v792 = vadd.f32 0.0, %v791
        %v793 = vpop.f32.mrb[0].mxu0
        %v794 = vadd.f32 0.0, %v793
        %795 = vmatprep.mubr.f32.mxu0 0.0
        %796 = vmatmul.mubr.f32.gmra.mrb[0].mxu0 %v555
        %v797 = vpop.f32.mrb[0].mxu0
        %v798 = vadd.f32 0.0, %v797
        %v799 = vpop.f32.mrb[0].mxu0
        %v800 = vadd.f32 0.0, %v799
        %801 = vmatprep.mubr.f32.mxu0 0.0
        %802 = vmatmul.mubr.f32.gmra.mrb[0].mxu0 %v558
        %v803 = vpop.f32.mrb[0].mxu0
        %v804 = vadd.f32 0.0, %v803
        %v805 = vpop.f32.mrb[0].mxu0
        %v806 = vadd.f32 0.0, %v805
        %807 = vmatprep.mubr.f32.mxu0 0.0
        %808 = vmatmul.mubr.f32.gmra.mrb[0].mxu0 %v561
        %v809 = vpop.f32.mrb[0].mxu0
        %v810 = vadd.f32 0.0, %v809
        %v811 = vpop.f32.mrb[0].mxu0
        %v812 = vadd.f32 0.0, %v811
        %813 = vmatprep.mubr.f32.mxu0 0.0
        %814 = vmatmul.mubr.f32.gmra.mrb[0].mxu0 %v564
        %v815 = vpop.f32.mrb[0].mxu0
        %v816 = vadd.f32 0.0, %v815
        %v817 = vpop.f32.mrb[0].mxu0
        %v818 = vadd.f32 0.0, %v817
        %819 = vmatprep.mubr.f32.mxu0 0.0
        %820 = vmatmul.mubr.f32.gmra.mrb[0].mxu0 %v567
        %v821 = vpop.f32.mrb[0].mxu0
        %v822 = vadd.f32 0.0, %v821
        %v823 = vpop.f32.mrb[0].mxu0
        %v824 = vadd.f32 0.0, %v823
        %825 = vdwg.mxu0
        %v826 = vadd.f32 %v358, %v636
        %v827 = vadd.f32 %v359, %v638
        %v828 = vadd.f32 %v360, %v642
        %v829 = vadd.f32 %v361, %v644
        %v830 = vadd.f32 %v362, %v648
        %v831 = vadd.f32 %v363, %v650
        %v832 = vadd.f32 %v364, %v654
        %v833 = vadd.f32 %v365, %v656
        %v834 = vadd.f32 %v366, %v660
        %v835 = vadd.f32 %v367, %v662
        %v836 = vadd.f32 %v368, %v666
        %v837 = vadd.f32 %v369, %v668
        %v838 = vadd.f32 %v370, %v672
        %v839 = vadd.f32 %v371, %v674
        %v840 = vadd.f32 %v372, %v678
        %v841 = vadd.f32 %v373, %v680
        %v842 = vadd.f32 %v374, %v684
        %v843 = vadd.f32 %v375, %v686
        %v844 = vadd.f32 %v376, %v690
        %v845 = vadd.f32 %v377, %v692
        %v846 = vadd.f32 %v378, %v696
        %v847 = vadd.f32 %v379, %v698
        %v848 = vadd.f32 %v380, %v702
        %v849 = vadd.f32 %v381, %v704
        %v850 = vadd.f32 %v382, %v708
        %v851 = vadd.f32 %v383, %v710
        %v852 = vadd.f32 %v384, %v714
        %v853 = vadd.f32 %v385, %v716
        %v854 = vadd.f32 %v386, %v720
        %v855 = vadd.f32 %v387, %v722
        %v856 = vadd.f32 %v388, %v726
        %v857 = vadd.f32 %v389, %v728
        %v858 = vadd.f32 %v390, %v732
        %v859 = vadd.f32 %v391, %v734
        %v860 = vadd.f32 %v392, %v738
        %v861 = vadd.f32 %v393, %v740
        %v862 = vadd.f32 %v394, %v744
        %v863 = vadd.f32 %v395, %v746
        %v864 = vadd.f32 %v396, %v750
        %v865 = vadd.f32 %v397, %v752
        %v866 = vadd.f32 %v398, %v756
        %v867 = vadd.f32 %v399, %v758
        %v868 = vadd.f32 %v400, %v762
        %v869 = vadd.f32 %v401, %v764
        %v870 = vadd.f32 %v402, %v768
        %v871 = vadd.f32 %v403, %v770
        %v872 = vadd.f32 %v404, %v774
        %v873 = vadd.f32 %v405, %v776
        %v874 = vadd.f32 %v406, %v780
        %v875 = vadd.f32 %v407, %v782
        %v876 = vadd.f32 %v408, %v786
        %v877 = vadd.f32 %v409, %v788
        %v878 = vadd.f32 %v410, %v792
        %v879 = vadd.f32 %v411, %v794
        %v880 = vadd.f32 %v412, %v798
        %v881 = vadd.f32 %v413, %v800
        %v882 = vadd.f32 %v414, %v804
        %v883 = vadd.f32 %v415, %v806
        %v884 = vadd.f32 %v416, %v810
        %v885 = vadd.f32 %v417, %v812
        %v886 = vadd.f32 %v418, %v816
        %v887 = vadd.f32 %v419, %v818
        %v888 = vadd.f32 %v420, %v822
        %v889 = vadd.f32 %v421, %v824
        %890 = vst [vmem:[#allocation2] sm:$0xff] %v826
        %891 = vst [vmem:[#allocation2 + $0x8] sm:$0xff] %v827
        %892 = vst [vmem:[#allocation2 + $0x10] sm:$0xff] %v828
        %893 = vst [vmem:[#allocation2 + $0x18] sm:$0xff] %v829
        %894 = vst [vmem:[#allocation2 + $0x20] sm:$0xff] %v830
        %895 = vst [vmem:[#allocation2 + $0x28] sm:$0xff] %v831
        %896 = vst [vmem:[#allocation2 + $0x30] sm:$0xff] %v832
        %897 = vst [vmem:[#allocation2 + $0x38] sm:$0xff] %v833
        %898 = vst [vmem:[#allocation2 + $0x40] sm:$0xff] %v834
        %899 = vst [vmem:[#allocation2 + $0x48] sm:$0xff] %v835
        %900 = vst [vmem:[#allocation2 + $0x50] sm:$0xff] %v836
        %901 = vst [vmem:[#allocation2 + $0x58] sm:$0xff] %v837
        %902 = vst [vmem:[#allocation2 + $0x60] sm:$0xff] %v838
        %903 = vst [vmem:[#allocation2 + $0x68] sm:$0xff] %v839
        %904 = vst [vmem:[#allocation2 + $0x70] sm:$0xff] %v840
        %905 = vst [vmem:[#allocation2 + $0x78] sm:$0xff] %v841
        %906 = vst [vmem:[#allocation2 + $0x80] sm:$0xff] %v842
        %907 = vst [vmem:[#allocation2 + $0x88] sm:$0xff] %v843
        %908 = vst [vmem:[#allocation2 + $0x90] sm:$0xff] %v844
        %909 = vst [vmem:[#allocation2 + $0x98] sm:$0xff] %v845
        %910 = vst [vmem:[#allocation2 + $0xa0] sm:$0xff] %v846
        %911 = vst [vmem:[#allocation2 + $0xa8] sm:$0xff] %v847
        %912 = vst [vmem:[#allocation2 + $0xb0] sm:$0xff] %v848
        %913 = vst [vmem:[#allocation2 + $0xb8] sm:$0xff] %v849
        %914 = vst [vmem:[#allocation2 + $0xc0] sm:$0xff] %v850
        %915 = vst [vmem:[#allocation2 + $0xc8] sm:$0xff] %v851
        %916 = vst [vmem:[#allocation2 + $0xd0] sm:$0xff] %v852
        %917 = vst [vmem:[#allocation2 + $0xd8] sm:$0xff] %v853
        %918 = vst [vmem:[#allocation2 + $0xe0] sm:$0xff] %v854
        %919 = vst [vmem:[#allocation2 + $0xe8] sm:$0xff] %v855
        %920 = vst [vmem:[#allocation2 + $0xf0] sm:$0xff] %v856
        %921 = vst [vmem:[#allocation2 + $0xf8] sm:$0xff] %v857
        %922 = vst [vmem:[#allocation2 + $0x100] sm:$0xff] %v858
        %923 = vst [vmem:[#allocation2 + $0x108] sm:$0xff] %v859
        %924 = vst [vmem:[#allocation2 + $0x110] sm:$0xff] %v860
        %925 = vst [vmem:[#allocation2 + $0x118] sm:$0xff] %v861
        %926 = vst [vmem:[#allocation2 + $0x120] sm:$0xff] %v862
        %927 = vst [vmem:[#allocation2 + $0x128] sm:$0xff] %v863
        %928 = vst [vmem:[#allocation2 + $0x130] sm:$0xff] %v864
        %929 = vst [vmem:[#allocation2 + $0x138] sm:$0xff] %v865
        %930 = vst [vmem:[#allocation2 + $0x140] sm:$0xff] %v866
        %931 = vst [vmem:[#allocation2 + $0x148] sm:$0xff] %v867
        %932 = vst [vmem:[#allocation2 + $0x150] sm:$0xff] %v868
        %933 = vst [vmem:[#allocation2 + $0x158] sm:$0xff] %v869
        %934 = vst [vmem:[#allocation2 + $0x160] sm:$0xff] %v870
        %935 = vst [vmem:[#allocation2 + $0x168] sm:$0xff] %v871
        %936 = vst [vmem:[#allocation2 + $0x170] sm:$0xff] %v872
        %937 = vst [vmem:[#allocation2 + $0x178] sm:$0xff] %v873
        %938 = vst [vmem:[#allocation2 + $0x180] sm:$0xff] %v874
        %939 = vst [vmem:[#allocation2 + $0x188] sm:$0xff] %v875
        %940 = vst [vmem:[#allocation2 + $0x190] sm:$0xff] %v876
        %941 = vst [vmem:[#allocation2 + $0x198] sm:$0xff] %v877
        %942 = vst [vmem:[#allocation2 + $0x1a0] sm:$0xff] %v878
        %943 = vst [vmem:[#allocation2 + $0x1a8] sm:$0xff] %v879
        %944 = vst [vmem:[#allocation2 + $0x1b0] sm:$0xff] %v880
        %945 = vst [vmem:[#allocation2 + $0x1b8] sm:$0xff] %v881
        %946 = vst [vmem:[#allocation2 + $0x1c0] sm:$0xff] %v882
        %947 = vst [vmem:[#allocation2 + $0x1c8] sm:$0xff] %v883
        %948 = vst [vmem:[#allocation2 + $0x1d0] sm:$0xff] %v884
        %949 = vst [vmem:[#allocation2 + $0x1d8] sm:$0xff] %v885
        %950 = vst [vmem:[#allocation2 + $0x1e0] sm:$0xff] %v886
        %951 = vst [vmem:[#allocation2 + $0x1e8] sm:$0xff] %v887
        %952 = vst [vmem:[#allocation2 + $0x1f0] sm:$0xff] %v888
        %953 = vst [vmem:[#allocation2 + $0x1f8] sm:$0xff] %v889
        // Predicated region
        $region37: #{tpu_custom_call.1} parent=31 // pred_check
          %p954 = pneg %p290
        $region38: #{tpu_custom_call.1} parent=31 // pred_check_branch
          %956 = sbr.rel (%p954) target = $region40
        $region39: #{tpu_custom_call.1} parent=31 // pred_region
          %v957 = vld [vmem:[#allocation2] sm:$0xff]
          %v958 = vld [vmem:[#allocation2 + $0x8] sm:$0xff]
          %v959 = vld [vmem:[#allocation2 + $0x10] sm:$0xff]
          %v960 = vld [vmem:[#allocation2 + $0x18] sm:$0xff]
          %v961 = vld [vmem:[#allocation2 + $0x20] sm:$0xff]
          %v962 = vld [vmem:[#allocation2 + $0x28] sm:$0xff]
          %v963 = vld [vmem:[#allocation2 + $0x30] sm:$0xff]
          %v964 = vld [vmem:[#allocation2 + $0x38] sm:$0xff]
          %v965 = vld [vmem:[#allocation2 + $0x40] sm:$0xff]
          %v966 = vld [vmem:[#allocation2 + $0x48] sm:$0xff]
          %v967 = vld [vmem:[#allocation2 + $0x50] sm:$0xff]
          %v968 = vld [vmem:[#allocation2 + $0x58] sm:$0xff]
          %v969 = vld [vmem:[#allocation2 + $0x60] sm:$0xff]
          %v970 = vld [vmem:[#allocation2 + $0x68] sm:$0xff]
          %v971 = vld [vmem:[#allocation2 + $0x70] sm:$0xff]
          %v972 = vld [vmem:[#allocation2 + $0x78] sm:$0xff]
          %v973 = vld [vmem:[#allocation2 + $0x80] sm:$0xff]
          %v974 = vld [vmem:[#allocation2 + $0x88] sm:$0xff]
          %v975 = vld [vmem:[#allocation2 + $0x90] sm:$0xff]
          %v976 = vld [vmem:[#allocation2 + $0x98] sm:$0xff]
          %v977 = vld [vmem:[#allocation2 + $0xa0] sm:$0xff]
          %v978 = vld [vmem:[#allocation2 + $0xa8] sm:$0xff]
          %v979 = vld [vmem:[#allocation2 + $0xb0] sm:$0xff]
          %v980 = vld [vmem:[#allocation2 + $0xb8] sm:$0xff]
          %v981 = vld [vmem:[#allocation2 + $0xc0] sm:$0xff]
          %v982 = vld [vmem:[#allocation2 + $0xc8] sm:$0xff]
          %v983 = vld [vmem:[#allocation2 + $0xd0] sm:$0xff]
          %v984 = vld [vmem:[#allocation2 + $0xd8] sm:$0xff]
          %v985 = vld [vmem:[#allocation2 + $0xe0] sm:$0xff]
          %v986 = vld [vmem:[#allocation2 + $0xe8] sm:$0xff]
          %v987 = vld [vmem:[#allocation2 + $0xf0] sm:$0xff]
          %v988 = vld [vmem:[#allocation2 + $0xf8] sm:$0xff]
          %v989 = vld [vmem:[#allocation2 + $0x100] sm:$0xff]
          %v990 = vld [vmem:[#allocation2 + $0x108] sm:$0xff]
          %v991 = vld [vmem:[#allocation2 + $0x110] sm:$0xff]
          %v992 = vld [vmem:[#allocation2 + $0x118] sm:$0xff]
          %v993 = vld [vmem:[#allocation2 + $0x120] sm:$0xff]
          %v994 = vld [vmem:[#allocation2 + $0x128] sm:$0xff]
          %v995 = vld [vmem:[#allocation2 + $0x130] sm:$0xff]
          %v996 = vld [vmem:[#allocation2 + $0x138] sm:$0xff]
          %v997 = vld [vmem:[#allocation2 + $0x140] sm:$0xff]
          %v998 = vld [vmem:[#allocation2 + $0x148] sm:$0xff]
          %v999 = vld [vmem:[#allocation2 + $0x150] sm:$0xff]
          %v1000 = vld [vmem:[#allocation2 + $0x158] sm:$0xff]
          %v1001 = vld [vmem:[#allocation2 + $0x160] sm:$0xff]
          %v1002 = vld [vmem:[#allocation2 + $0x168] sm:$0xff]
          %v1003 = vld [vmem:[#allocation2 + $0x170] sm:$0xff]
          %v1004 = vld [vmem:[#allocation2 + $0x178] sm:$0xff]
          %v1005 = vld [vmem:[#allocation2 + $0x180] sm:$0xff]
          %v1006 = vld [vmem:[#allocation2 + $0x188] sm:$0xff]
          %v1007 = vld [vmem:[#allocation2 + $0x190] sm:$0xff]
          %v1008 = vld [vmem:[#allocation2 + $0x198] sm:$0xff]
          %v1009 = vld [vmem:[#allocation2 + $0x1a0] sm:$0xff]
          %v1010 = vld [vmem:[#allocation2 + $0x1a8] sm:$0xff]
          %v1011 = vld [vmem:[#allocation2 + $0x1b0] sm:$0xff]
          %v1012 = vld [vmem:[#allocation2 + $0x1b8] sm:$0xff]
          %v1013 = vld [vmem:[#allocation2 + $0x1c0] sm:$0xff]
          %v1014 = vld [vmem:[#allocation2 + $0x1c8] sm:$0xff]
          %v1015 = vld [vmem:[#allocation2 + $0x1d0] sm:$0xff]
          %v1016 = vld [vmem:[#allocation2 + $0x1d8] sm:$0xff]
          %v1017 = vld [vmem:[#allocation2 + $0x1e0] sm:$0xff]
          %v1018 = vld [vmem:[#allocation2 + $0x1e8] sm:$0xff]
          %v1019 = vld [vmem:[#allocation2 + $0x1f0] sm:$0xff]
          %v1020 = vld [vmem:[#allocation2 + $0x1f8] sm:$0xff]
          %v1021 = vld [vmem:[%s281] sm:$0x3]
          %v1023 = vlaneseq
          %v1024 = vshrl.u32 %v1023, 7
          %v1025 = vsub.s32 0, %v1024
          %v1026 = vrot.slane %v1021, %v1025
          %v1027 = vlaneseq
          %v1028 = vshrl.u32 %v1027, 7
          %v1029 = vsub.s32 1, %v1028
          %v1030 = vrot.slane %v1021, %v1029
          %v1033 = vadd.f32 %v957, %v1026
          %v1034 = vadd.f32 %v958, %v1030
          %v1035 = vadd.f32 %v959, %v1026
          %v1036 = vadd.f32 %v960, %v1030
          %v1037 = vadd.f32 %v961, %v1026
          %v1038 = vadd.f32 %v962, %v1030
          %v1039 = vadd.f32 %v963, %v1026
          %v1040 = vadd.f32 %v964, %v1030
          %v1041 = vadd.f32 %v965, %v1026
          %v1042 = vadd.f32 %v966, %v1030
          %v1043 = vadd.f32 %v967, %v1026
          %v1044 = vadd.f32 %v968, %v1030
          %v1045 = vadd.f32 %v969, %v1026
          %v1046 = vadd.f32 %v970, %v1030
          %v1047 = vadd.f32 %v971, %v1026
          %v1048 = vadd.f32 %v972, %v1030
          %v1049 = vadd.f32 %v973, %v1026
          %v1050 = vadd.f32 %v974, %v1030
          %v1051 = vadd.f32 %v975, %v1026
          %v1052 = vadd.f32 %v976, %v1030
          %v1053 = vadd.f32 %v977, %v1026
          %v1054 = vadd.f32 %v978, %v1030
          %v1055 = vadd.f32 %v979, %v1026
          %v1056 = vadd.f32 %v980, %v1030
          %v1057 = vadd.f32 %v981, %v1026
          %v1058 = vadd.f32 %v982, %v1030
          %v1059 = vadd.f32 %v983, %v1026
          %v1060 = vadd.f32 %v984, %v1030
          %v1061 = vadd.f32 %v985, %v1026
          %v1062 = vadd.f32 %v986, %v1030
          %v1063 = vadd.f32 %v987, %v1026
          %v1064 = vadd.f32 %v988, %v1030
          %v1065 = vadd.f32 %v989, %v1026
          %v1066 = vadd.f32 %v990, %v1030
          %v1067 = vadd.f32 %v991, %v1026
          %v1068 = vadd.f32 %v992, %v1030
          %v1069 = vadd.f32 %v993, %v1026
          %v1070 = vadd.f32 %v994, %v1030
          %v1071 = vadd.f32 %v995, %v1026
          %v1072 = vadd.f32 %v996, %v1030
          %v1073 = vadd.f32 %v997, %v1026
          %v1074 = vadd.f32 %v998, %v1030
          %v1075 = vadd.f32 %v999, %v1026
          %v1076 = vadd.f32 %v1000, %v1030
          %v1077 = vadd.f32 %v1001, %v1026
          %v1078 = vadd.f32 %v1002, %v1030
          %v1079 = vadd.f32 %v1003, %v1026
          %v1080 = vadd.f32 %v1004, %v1030
          %v1081 = vadd.f32 %v1005, %v1026
          %v1082 = vadd.f32 %v1006, %v1030
          %v1083 = vadd.f32 %v1007, %v1026
          %v1084 = vadd.f32 %v1008, %v1030
          %v1085 = vadd.f32 %v1009, %v1026
          %v1086 = vadd.f32 %v1010, %v1030
          %v1087 = vadd.f32 %v1011, %v1026
          %v1088 = vadd.f32 %v1012, %v1030
          %v1089 = vadd.f32 %v1013, %v1026
          %v1090 = vadd.f32 %v1014, %v1030
          %v1091 = vadd.f32 %v1015, %v1026
          %v1092 = vadd.f32 %v1016, %v1030
          %v1093 = vadd.f32 %v1017, %v1026
          %v1094 = vadd.f32 %v1018, %v1030
          %v1095 = vadd.f32 %v1019, %v1026
          %v1096 = vadd.f32 %v1020, %v1030
          %1097 = vst [vmem:[%s248] sm:$0xff] %v1033
          %1098 = vst [vmem:[%s248 + $0x8] sm:$0xff] %v1034
          %1099 = vst [vmem:[%s248 + $0x10] sm:$0xff] %v1035
          %1100 = vst [vmem:[%s248 + $0x18] sm:$0xff] %v1036
          %1101 = vst [vmem:[%s248 + $0x20] sm:$0xff] %v1037
          %1102 = vst [vmem:[%s248 + $0x28] sm:$0xff] %v1038
          %1103 = vst [vmem:[%s248 + $0x30] sm:$0xff] %v1039
          %1104 = vst [vmem:[%s248 + $0x38] sm:$0xff] %v1040
          %1105 = vst [vmem:[%s248 + $0x40] sm:$0xff] %v1041
          %1106 = vst [vmem:[%s248 + $0x48] sm:$0xff] %v1042
          %1107 = vst [vmem:[%s248 + $0x50] sm:$0xff] %v1043
          %1108 = vst [vmem:[%s248 + $0x58] sm:$0xff] %v1044
          %1109 = vst [vmem:[%s248 + $0x60] sm:$0xff] %v1045
          %1110 = vst [vmem:[%s248 + $0x68] sm:$0xff] %v1046
          %1111 = vst [vmem:[%s248 + $0x70] sm:$0xff] %v1047
          %1112 = vst [vmem:[%s248 + $0x78] sm:$0xff] %v1048
          %1113 = vst [vmem:[%s248 + $0x80] sm:$0xff] %v1049
          %1114 = vst [vmem:[%s248 + $0x88] sm:$0xff] %v1050
          %1115 = vst [vmem:[%s248 + $0x90] sm:$0xff] %v1051
          %1116 = vst [vmem:[%s248 + $0x98] sm:$0xff] %v1052
          %1117 = vst [vmem:[%s248 + $0xa0] sm:$0xff] %v1053
          %1118 = vst [vmem:[%s248 + $0xa8] sm:$0xff] %v1054
          %1119 = vst [vmem:[%s248 + $0xb0] sm:$0xff] %v1055
          %1120 = vst [vmem:[%s248 + $0xb8] sm:$0xff] %v1056
          %1121 = vst [vmem:[%s248 + $0xc0] sm:$0xff] %v1057
          %1122 = vst [vmem:[%s248 + $0xc8] sm:$0xff] %v1058
          %1123 = vst [vmem:[%s248 + $0xd0] sm:$0xff] %v1059
          %1124 = vst [vmem:[%s248 + $0xd8] sm:$0xff] %v1060
          %1125 = vst [vmem:[%s248 + $0xe0] sm:$0xff] %v1061
          %1126 = vst [vmem:[%s248 + $0xe8] sm:$0xff] %v1062
          %1127 = vst [vmem:[%s248 + $0xf0] sm:$0xff] %v1063
          %1128 = vst [vmem:[%s248 + $0xf8] sm:$0xff] %v1064
          %1129 = vst [vmem:[%s248 + $0x100] sm:$0xff] %v1065
          %1130 = vst [vmem:[%s248 + $0x108] sm:$0xff] %v1066
          %1131 = vst [vmem:[%s248 + $0x110] sm:$0xff] %v1067
          %1132 = vst [vmem:[%s248 + $0x118] sm:$0xff] %v1068
          %1133 = vst [vmem:[%s248 + $0x120] sm:$0xff] %v1069
          %1134 = vst [vmem:[%s248 + $0x128] sm:$0xff] %v1070
          %1135 = vst [vmem:[%s248 + $0x130] sm:$0xff] %v1071
          %1136 = vst [vmem:[%s248 + $0x138] sm:$0xff] %v1072
          %1137 = vst [vmem:[%s248 + $0x140] sm:$0xff] %v1073
          %1138 = vst [vmem:[%s248 + $0x148] sm:$0xff] %v1074
          %1139 = vst [vmem:[%s248 + $0x150] sm:$0xff] %v1075
          %1140 = vst [vmem:[%s248 + $0x158] sm:$0xff] %v1076
          %1141 = vst [vmem:[%s248 + $0x160] sm:$0xff] %v1077
          %1142 = vst [vmem:[%s248 + $0x168] sm:$0xff] %v1078
          %1143 = vst [vmem:[%s248 + $0x170] sm:$0xff] %v1079
          %1144 = vst [vmem:[%s248 + $0x178] sm:$0xff] %v1080
          %1145 = vst [vmem:[%s248 + $0x180] sm:$0xff] %v1081
          %1146 = vst [vmem:[%s248 + $0x188] sm:$0xff] %v1082
          %1147 = vst [vmem:[%s248 + $0x190] sm:$0xff] %v1083
          %1148 = vst [vmem:[%s248 + $0x198] sm:$0xff] %v1084
          %1149 = vst [vmem:[%s248 + $0x1a0] sm:$0xff] %v1085
          %1150 = vst [vmem:[%s248 + $0x1a8] sm:$0xff] %v1086
          %1151 = vst [vmem:[%s248 + $0x1b0] sm:$0xff] %v1087
          %1152 = vst [vmem:[%s248 + $0x1b8] sm:$0xff] %v1088
          %1153 = vst [vmem:[%s248 + $0x1c0] sm:$0xff] %v1089
          %1154 = vst [vmem:[%s248 + $0x1c8] sm:$0xff] %v1090
          %1155 = vst [vmem:[%s248 + $0x1d0] sm:$0xff] %v1091
          %1156 = vst [vmem:[%s248 + $0x1d8] sm:$0xff] %v1092
          %1157 = vst [vmem:[%s248 + $0x1e0] sm:$0xff] %v1093
          %1158 = vst [vmem:[%s248 + $0x1e8] sm:$0xff] %v1094
          %1159 = vst [vmem:[%s248 + $0x1f0] sm:$0xff] %v1095
          %1160 = vst [vmem:[%s248 + $0x1f8] sm:$0xff] %v1096
        $region40: #{tpu_custom_call.1} parent=31 // pred_fallthru
          _
        %s1161 = sand.u32 %s128, 1
        %s1162 = scalar_lea.sflag [#allocation4], %s1161
        %s1163 = sand.u32 %s128, 1
        %s1164 = smul.addr %s1163, 512
        %s1165 = scalar_lea.vmem [#allocation3], %s1164
        // Predicated region
        $region41: #{tpu_custom_call.1} parent=31 // pred_check
          %p1166 = pneg %p138
        $region42: #{tpu_custom_call.1} parent=31 // pred_check_branch
          %1168 = sbr.rel (%p1166) target = $region44
        $region43: #{tpu_custom_call.1} parent=31 // pred_region
          %s1169 = smul.u32 32, %s22
          %s1170 = smul.u32 2, %s23
          %s1171 = ssub.s32 49, %s1169
          %p1172 = scmp.lt.s32.totalorder %s1171, 32
          %s1173 = scalar_select %p1172, %s1171, 32
          %s1174 = smul.u32 128, %s1173
          %s1175 = smul.u32 %s1174, 2
          %s1177 = ssub.s32 8192, %s1175
          %1178 = vsyncadd %s1162, %s1177
          %p1179 = scmp.ne.s32.totalorder 0, %s1175
          %s1180 = smul.addr %s1169, 2
          %s1181 = sadd.s32 %s1170, %s1180
          %s1182 = smul.addr %s1181, 128
          %s1183 = scalar_lea.hbm %s3, %s1182
          %s1184 = smul.u32 16, %s1173
          %s1185 = sshll.u32 %s1165, 4
          %s1186 = int_to_ptr.vmem [resolvable:$true] %s1185
          %s1187 = sshll.u32 %s1184, 4
          %1191 = dma.vmem_to_hbm [thread:$0]  (%p1179), %s1186, %s1187, %s1183, %s1162, 256, 256, 16
        $region44: #{tpu_custom_call.1} parent=31 // pred_fallthru
          _
      $region32: #{tpu_custom_call.1} parent=5 // pred_fallthru
        _
      %p1192 = scmp.le.s32.totalorder 2, %s12
      // Predicated region
      $region45: #{tpu_custom_call.1} parent=5 // pred_check
        %p1193 = pneg %p1192
      $region46: #{tpu_custom_call.1} parent=5 // pred_check_branch
        %1195 = sbr.rel (%p1193) target = $region48
      $region47: #{tpu_custom_call.1} parent=5 // pred_region
        %s1196 = ssub.s32 %s12, 2
        // Predicated region
        $region49: #{tpu_custom_call.1} parent=47 // pred_check
          %p1197 = pneg %p144
        $region50: #{tpu_custom_call.1} parent=47 // pred_check_branch
          %1199 = sbr.rel (%p1197) target = $region52
        $region51: #{tpu_custom_call.1} parent=47 // pred_region
          %s1200 = sand.u32 %s129, 1
          %s1201 = scalar_lea.sflag [#allocation4], %s1200
          %s1202 = sand.u32 %s129, 1
          %s1203 = smul.addr %s1202, 512
          %s1204 = scalar_lea.vmem [#allocation3], %s1203
          %1205 = dma.done %s1201, 8192
        $region52: #{tpu_custom_call.1} parent=47 // pred_fallthru
          _
      $region48: #{tpu_custom_call.1} parent=5 // pred_fallthru
        _
    $region6: #{tpu_custom_call.1} parent=1 // loop_footer
      %s16 = sadd.s32 1, %s12
    $region7: #{tpu_custom_call.1} parent=1 // loop_footer_branch
      %11 = sbr.rel target = $region3
    $region8: #{tpu_custom_call.1} parent=1 // loop_exit
      _
    %1206 = vsyncpa [#allocation4], 1
    %s1207 = scalar_lea.sflag [#allocation4], 1
    %1208 = vsyncpa %s1207, 1

</llo_original>
